<compile_context>
chip_gen: v6e
topology: v6e:2x2x1
jax: 0.10.0
libtpu: 0.0.40
codegen_flags: <defaults>
</compile_context>

<pallas_src>
import functools

import jax
import jax.numpy as jnp
from jax import lax
from jax.experimental import pallas as pl
from jax.experimental.pallas import tpu as pltpu


def _round_up(x, m):
    return (x + m - 1) // m * m


# ----------------------------------------------------------------------------
# Kernel body
# ----------------------------------------------------------------------------
def _make_vq_kernel(*, hw, t, k, nt_s, compute_dw, needs_mask):
    """Grid = (n_split, B, nt_s).  Per grid step:
      x_ref    : (1, C, t)     input dtype   NCHW slab (channels on sublanes)
      e_ref    : (K, C)        f32           codebook (grid-invariant)
      et_ref   : (C, K)        f32           codebook^T (grid-invariant)
      esq_ref  : (K, 1)        f32           ||e||^2 (hoisted)
      q_ref    : (1, C, t)     input dtype   quantized (NCHW layout)
      idx_ref  : (1, 1, 1, t)  i32           nearest-code indices (lane-dense)
      cnt_ref  : (1, 1, K, 1)  f32           per-(split,batch) counts (accum)
      loss_ref : (1, 1, 1, 1)  f32           per-(split,batch) sum (q-x)^2 (accum)
      dwt_ref  : (1, 1, C, K)  f32           per-(split,batch) dw^T (accum, train)
    """

    def kernel(x_ref, e_ref, et_ref, esq_ref, q_ref, idx_ref, cnt_ref,
               loss_ref, *rest):
        dwt_ref = rest[0] if compute_dw else None
        j = pl.program_id(2)

        # Accumulators live across the (arbitrary, innermost) pixel-tile axis.
        @pl.when(j == 0)
        def _():
            cnt_ref[...] = jnp.zeros_like(cnt_ref)
            loss_ref[...] = jnp.zeros_like(loss_ref)
            if compute_dw:
                dwt_ref[...] = jnp.zeros_like(dwt_ref)

        # Native-width DMA; cast to f32 in-vreg (free-ish on VPU).
        xf = x_ref[0].astype(jnp.float32)                              # (C, t)

        # distances: ||x||^2 dropped (argmin-invariant), ||e||^2 hoisted.
        # Canonical (K,C) x (C,t) matmul -> (K, t).
        # TODO(synk): torch uses f32-HIGHEST matmul; near-tie argmins could
        # differ at default Mosaic f32 MXU precision.
        cross = jnp.dot(e_ref[...], xf, preferred_element_type=jnp.float32)
        dist = esq_ref[...] - 2.0 * cross                              # (K, t)

        # argmin over the (short) K/sublane axis, first-occurrence tie-break.
        row = lax.broadcasted_iota(jnp.int32, (k, t), 0)               # (K, t)
        min_d = jnp.min(dist, axis=0, keepdims=True)                   # (1, t)
        idx = jnp.min(jnp.where(dist == min_d, row, k),
                      axis=0, keepdims=True).astype(jnp.int32)         # (1, t)

        enc = (row == idx).astype(jnp.float32)                         # (K, t)
        if needs_mask:
            # Mask padded pixels out of counts / dw / loss / q.
            g = pl.program_id(0) * nt_s + j
            col = lax.broadcasted_iota(jnp.int32, (1, t), 1) + g * t
            enc = enc * (col < hw).astype(jnp.float32)

        # quantized: canonical (C,K) x (K,t) -> (C,t), already NCHW layout.
        q = jnp.dot(et_ref[...], enc, preferred_element_type=jnp.float32)
        q_ref[...] = q[None].astype(q_ref.dtype)
        idx_ref[...] = idx.reshape(1, 1, 1, t)

        # Fused commitment-loss partial sum (padded pixels contribute 0:
        # q is masked to 0 and x is zero-padded there).
        d = q - xf
        part = jnp.sum(d * d, axis=1, keepdims=True)                   # (C, 1)
        loss_ref[...] += jnp.sum(part, axis=0, keepdims=True)[None, None]

        cnt_ref[...] += jnp.sum(enc, axis=1, keepdims=True)[None, None]

        if compute_dw:
            # dw^T = x @ enc^T -> (C, K); lhs contracts its last dim
            # (canonical), the "transposed" operand is the one-hot, not the
            # activation tile.  Transposed back once in the wrapper.
            dwt = lax.dot_general(xf, enc, (((1,), (1,)), ((), ())),
                                  preferred_element_type=jnp.float32)
            dwt_ref[...] += dwt[None, None]

    return kernel


# ----------------------------------------------------------------------------
# Tile / VMEM budgeting
# ----------------------------------------------------------------------------
def _vmem_budget_bytes():
    cap = 64 * 1024 * 1024          # safe default (v7x per-core VMEM)
    try:
        cap = int(pltpu.get_tpu_info().vmem_capacity_bytes)
    except Exception:
        pass
    # Headroom for Mosaic internal scratch; ~48 MiB on v7x, ~100 MiB on v5e/v6e.
    return max(min(cap - 16 * 1024 * 1024, 100 * 1024 * 1024), 32 * 1024 * 1024)


def _choose_tile(*, hw, c, k, x_bytes, compute_dw, max_tile_hw):
    budget = _vmem_budget_bytes()
    # Bytes that scale with the pixel tile width t (double-buffered DMA tiles
    # plus in-kernel f32 temporaries).
    per_t = (2 * c * x_bytes            # x tile (double-buffered)
             + 2 * c * x_bytes          # q tile
             + 2 * 4                    # idx tile
             + 3 * c * 4                # xf / q / diff f32 temporaries
             + (5 if compute_dw else 4) * k * 4)   # cross, dist, iota, one-hot(s)
    const = (2 * (2 * k * c * 4 + k * 4)                               # e, e_T, ||e||^2
             + 2 * (k * 4 + 4 + (c * k * 4 if compute_dw else 0)))     # accumulators
    t_fit = (budget - const) // max(per_t, 1)
    t_cap = int(max(min(t_fit, max_tile_hw), 128))

    if hw <= t_cap:
        t, hw_pad = hw, hw                       # full extent, no padding
    else:
        t_cap = (t_cap // 128) * 128
        t = 0
        cand = t_cap
        while cand >= 128:                       # largest 128-multiple divisor
            if hw % cand == 0:
                t = cand
                break
            cand -= 128
        if t:
            hw_pad = hw                          # divides exactly -> no padding
        else:
            # TODO(synk): ragged last tile could be handled in-kernel to avoid
            # the pad/slice HBM passes; kept as a rare fallback.
            t = t_cap
            hw_pad = _round_up(hw, t)

    est = const + per_t * t
    vmem_limit = int(min(max(2 * est, 32 * 1024 * 1024), budget))
    return t, hw_pad, vmem_limit


# ----------------------------------------------------------------------------
# pallas_call wrapper
# ----------------------------------------------------------------------------
def _vq_pallas(x_bc_hw, emb, e_t, e_sq, *, t, hw, hw_pad, n_split, compute_dw,
               vmem_limit):
    b, c, _ = x_bc_hw.shape
    k = emb.shape[0]
    nt = hw_pad // t
    nt_s = nt // n_split
    needs_mask = hw_pad != hw
    x_dtype = x_bc_hw.dtype

    out_shape = [
        jax.ShapeDtypeStruct((b, c, hw_pad), x_dtype),           # quantized (NCHW)
        jax.ShapeDtypeStruct((b, nt, 1, t), jnp.int32),          # indices (lane-dense)
        jax.ShapeDtypeStruct((n_split, b, k, 1), jnp.float32),   # partial counts
        jax.ShapeDtypeStruct((n_split, b, 1, 1), jnp.float32),   # partial sum (q-x)^2
    ]
    out_specs = [
        pl.BlockSpec((1, c, t), lambda s, bb, j: (bb, 0, s * nt_s + j)),
        pl.BlockSpec((1, 1, 1, t), lambda s, bb, j: (bb, s * nt_s + j, 0, 0)),
        pl.BlockSpec((1, 1, k, 1), lambda s, bb, j: (s, bb, 0, 0)),
        pl.BlockSpec((1, 1, 1, 1), lambda s, bb, j: (s, bb, 0, 0)),
    ]
    if compute_dw:
        out_shape.append(jax.ShapeDtypeStruct((n_split, b, c, k), jnp.float32))
        out_specs.append(pl.BlockSpec((1, 1, c, k), lambda s, bb, j: (s, bb, 0, 0)))

    return pl.pallas_call(
        _make_vq_kernel(hw=hw, t=t, k=k, nt_s=nt_s,
                        compute_dw=compute_dw, needs_mask=needs_mask),
        out_shape=tuple(out_shape),
        grid_spec=pltpu.PrefetchScalarGridSpec(
            num_scalar_prefetch=0,
            grid=(n_split, b, nt_s),
            in_specs=[
                pl.BlockSpec((1, c, t), lambda s, bb, j: (bb, 0, s * nt_s + j)),
                pl.BlockSpec((k, c), lambda s, bb, j: (0, 0)),
                pl.BlockSpec((c, k), lambda s, bb, j: (0, 0)),
                pl.BlockSpec((k, 1), lambda s, bb, j: (0, 0)),
            ],
            out_specs=tuple(out_specs),
        ),
        compiler_params=pltpu.CompilerParams(
            # Core-split and batch axes feed both v7x TensorCores (partial
            # accumulators keep them race-free); the pixel-tile axis carries
            # the accumulators, so it stays serial.
            dimension_semantics=("parallel", "parallel", "arbitrary"),
            vmem_limit_bytes=int(vmem_limit),
        ),
    )(x_bc_hw, emb, e_t, e_sq)


# ----------------------------------------------------------------------------
# Public forward (mirrors VectorQuantizerEMA.forward)
# ----------------------------------------------------------------------------
def vector_quantizer_ema_forward(
    x_nchw,
    embedding,           # (K, D)  codebook (nn.Embedding.weight)
    ema_cluster_size,    # (K,)    buffer
    ema_w,               # (K, D)  buffer
    *,
    beta,
    decay,
    epsilon=1e-5,
    training=False,
    max_tile_hw=4096,    # upper bound on pixel tile; budget-aware chooser may shrink it
):
    """Returns (loss, quantized_nchw, perplexity, indices_bhw,
                new_embedding, new_ema_cluster_size, new_ema_w)."""
    b, c, h, w = x_nchw.shape
    k, d = embedding.shape
    assert c == d, "channel dim must equal embedding dim"
    hw = h * w

    # Free, contiguous reshape; keep the input dtype (bf16 stays bf16 over HBM).
    x_flat = x_nchw.reshape(b, c, hw)

    emb32 = embedding.astype(jnp.float32)
    e_t = jnp.transpose(emb32)                                   # (C, K), hoisted once
    e_sq = jnp.sum(emb32 * emb32, axis=1, keepdims=True)         # (K, 1), hoisted once

    t, hw_pad, vmem_limit = _choose_tile(
        hw=hw, c=c, k=k, x_bytes=x_flat.dtype.itemsize,
        compute_dw=training, max_tile_hw=max_tile_hw)
    nt = hw_pad // t
    # Split the pixel-tile axis across cores when batch alone can't (B==1/odd).
    n_split = 2 if (b % 2 == 1 and nt % 2 == 0 and nt >= 2) else 1

    if hw_pad != hw:
        x_in = jnp.pad(x_flat, ((0, 0), (0, 0), (0, hw_pad - hw)))
    else:
        x_in = x_flat

    outs = _vq_pallas(x_in, emb32, e_t, e_sq, t=t, hw=hw, hw_pad=hw_pad,
                      n_split=n_split, compute_dw=training,
                      vmem_limit=vmem_limit)
    if training:
        q_pad, idx_out, cnt_out, sq_out, dwt_out = outs
    else:
        q_pad, idx_out, cnt_out, sq_out = outs
        dwt_out = None

    quantized = (q_pad if hw_pad == hw else q_pad[:, :, :hw]).reshape(b, c, h, w)
    indices = idx_out.reshape(b, -1)[:, :hw].reshape(b, h, w)
    counts = jnp.sum(cnt_out, axis=(0, 1))[:, 0]                  # (K,)

    new_embedding, new_cluster_size, new_ema_w = embedding, ema_cluster_size, ema_w
    if training:
        dw = jnp.transpose(jnp.sum(dwt_out, axis=(0, 1)))         # (K, D)
        new_cluster_size = ema_cluster_size * decay + (1.0 - decay) * counts
        n_total = jnp.sum(new_cluster_size)
        new_cluster_size = ((new_cluster_size + epsilon)
                            / (n_total + k * epsilon) * n_total)
        new_ema_w = ema_w * decay + (1.0 - decay) * dw
        new_embedding = new_ema_w / new_cluster_size[:, None]

    # Commitment loss from the fused in-kernel partial sums (no HBM re-read).
    e_latent_loss = jnp.sum(sq_out) / jnp.float32(b * hw * c)
    loss = beta * e_latent_loss

    avg_probs = counts / jnp.float32(b * hw)
    perplexity = jnp.exp(-jnp.sum(avg_probs * jnp.log(avg_probs + 1e-10)))

    # TODO(synk): the straight-through estimator x + stop_grad(q - x) only
    # differs from q in the backward pass; pallas_call has no autodiff here,
    # so we return q directly (add a custom_vjp if gradients are needed).
    return (loss, quantized, perplexity, indices,
            new_embedding, new_cluster_size, new_ema_w)


# ----------------------------------------------------------------------------
# Pure-JAX reference (mirrors the PyTorch forward) + checks
# ----------------------------------------------------------------------------
def _reference_forward(x, embedding, ema_cluster_size, ema_w, *, beta, decay,
                       eps, training):
    hp = jax.lax.Precision.HIGHEST
    b, c, h, w = x.shape
    k, d = embedding.shape
    xf = x.astype(jnp.float32)
    flat = jnp.transpose(xf, (0, 2, 3, 1)).reshape(-1, d)
    emb = embedding.astype(jnp.float32)
    dist = (jnp.sum(flat ** 2, axis=1, keepdims=True)
            + jnp.sum(emb ** 2, axis=1)[None, :]
            - 2.0 * jnp.matmul(flat, emb.T, precision=hp))
    idx = jnp.argmin(dist, axis=1).astype(jnp.int32)
    enc = jax.nn.one_hot(idx, k, dtype=jnp.float32)
    q = jnp.matmul(enc, emb, precision=hp).reshape(b, h, w, c).transpose(0, 3, 1, 2)
    loss = beta * jnp.mean((q - xf) ** 2)
    counts = enc.sum(0)
    avg = counts / flat.shape[0]
    perp = jnp.exp(-jnp.sum(avg * jnp.log(avg + 1e-10)))
    new_emb, new_cs, new_ema_w = embedding, ema_cluster_size, ema_w
    if training:
        new_cs = ema_cluster_size * decay + (1.0 - decay) * counts
        n = jnp.sum(new_cs)
        new_cs = (new_cs + eps) / (n + k * eps) * n
        dw = jnp.matmul(enc.T, flat, precision=hp)
        new_ema_w = ema_w * decay + (1.0 - decay) * dw
        new_emb = new_ema_w / new_cs[:, None]
    return loss, q, perp, idx.reshape(b, h, w), new_emb, new_cs, new_ema_w


def _check(name, got, ref):
    loss, q, perp, idx, emb, cs, ew = got
    loss_r, q_r, perp_r, idx_r, emb_r, cs_r, ew_r = ref
    assert loss.shape == () and perp.shape == (), f"{name}: scalar shape"
    assert q.shape == q_r.shape, f"{name}: quantized shape"
    assert idx.shape == idx_r.shape, f"{name}: indices shape"
    assert jnp.array_equal(idx, idx_r), f"{name}: index mismatch"
    assert jnp.allclose(q, q_r, atol=1e-5, rtol=1e-5), f"{name}: quantized mismatch"
    assert jnp.allclose(loss, loss_r, atol=1e-5, rtol=1e-5), f"{name}: loss mismatch"
    assert jnp.allclose(perp, perp_r, atol=1e-4, rtol=1e-4), f"{name}: perplexity mismatch"
    assert jnp.allclose(cs, cs_r, atol=1e-5, rtol=1e-5), f"{name}: cluster-size mismatch"
    assert jnp.allclose(emb, emb_r, atol=1e-4, rtol=1e-4), f"{name}: embedding mismatch"
    assert jnp.allclose(ew, ew_r, atol=1e-4, rtol=1e-4), f"{name}: ema_w mismatch"


if __name__ == "__main__":
    num_embed = 16     # K
    embed_dim = 8      # D == C
    beta = 0.25
    decay = 0.99
    eps = 1e-5

    key = jax.random.PRNGKey(0)
    k_emb, k_ema, k_x1, k_x2, k_x3 = jax.random.split(key, 5)

    embedding = jax.random.normal(k_emb, (num_embed, embed_dim), jnp.float32)
    ema_w = jax.random.normal(k_ema, (num_embed, embed_dim), jnp.float32)
    ema_cluster_size = jnp.zeros((num_embed,), jnp.float32)

    def run(x, *, training, max_tile_hw, name):
        fwd = jax.jit(functools.partial(
            vector_quantizer_ema_forward, beta=beta, decay=decay, epsilon=eps,
            training=training, max_tile_hw=max_tile_hw))
        got = fwd(x, embedding, ema_cluster_size, ema_w)
        jax.block_until_ready(got)
        ref = _reference_forward(x, embedding, ema_cluster_size, ema_w,
                                 beta=beta, decay=decay, eps=eps,
                                 training=training)
        _check(name, got, ref)
        return got

    # 1) Main config: single full-extent tile, eval and train paths.
    x1 = jax.random.normal(k_x1, (2, embed_dim, 8, 8), jnp.float32)
    run(x1, training=False, max_tile_hw=4096, name="eval(2,8,8,8)")
    run(x1, training=True, max_tile_hw=4096, name="train(2,8,8,8)")

    # 2) Tiled + core-split config (B=1, divisor tile -> no padding).
    x2 = jax.random.normal(k_x2, (1, embed_dim, 16, 16), jnp.float32)
    run(x2, training=True, max_tile_hw=128, name="train(1,8,16,16)-split")

    # 3) Padding/masking fallback config (hw not tile-divisible).
    x3 = jax.random.normal(k_x3, (2, embed_dim, 12, 12), jnp.float32)
    run(x3, training=True, max_tile_hw=128, name="train(2,8,12,12)-pad")

    print("KERNEL_OK")
</pallas_src>

<mosaic_0001>
module attributes {stable_mosaic.version = 11 : i64} {
  func.func @kernel(%arg0: i32, %arg1: i32, %arg2: i32, %arg3: memref<1x8x64xf32, #tpu.memory_space<vmem>>, %arg4: memref<16x8xf32, #tpu.memory_space<vmem>>, %arg5: memref<8x16xf32, #tpu.memory_space<vmem>>, %arg6: memref<16x1xf32, #tpu.memory_space<vmem>>, %arg7: memref<1x8x64xf32, #tpu.memory_space<vmem>>, %arg8: memref<1x1x1x64xi32, #tpu.memory_space<vmem>>, %arg9: memref<1x1x16x1xf32, #tpu.memory_space<vmem>>, %arg10: memref<1x1x1x1xf32, #tpu.memory_space<vmem>>) attributes {dimension_semantics = [#tpu.dimension_semantics<parallel>, #tpu.dimension_semantics<parallel>, #tpu.dimension_semantics<arbitrary>], iteration_bounds = array<i64: 1, 2, 1>, scalar_prefetch = 0 : i64, scratch_operands = 0 : i64, tpu.core_type = #tpu.core_type<tc>, window_params = [{transform_indices = @transform_0, window_bounds = array<i64: 1, 8, 64>}, {pipeline_mode = #tpu.pipeline_mode<synchronous>, transform_indices = @transform_1, window_bounds = array<i64: 16, 8>}, {pipeline_mode = #tpu.pipeline_mode<synchronous>, transform_indices = @transform_2, window_bounds = array<i64: 8, 16>}, {pipeline_mode = #tpu.pipeline_mode<synchronous>, transform_indices = @transform_3, window_bounds = array<i64: 16, 1>}, {transform_indices = @transform_4, window_bounds = array<i64: 1, 8, 64>}, {transform_indices = @transform_5, window_bounds = array<i64: 1, 1, 1, 64>}, {transform_indices = @transform_6, window_bounds = array<i64: 1, 1, 16, 1>}, {transform_indices = @transform_7, window_bounds = array<i64: 1, 1, 1, 1>}]} {
    %c0_i32 = arith.constant 0 : i32
    %0 = arith.cmpi eq, %arg2, %c0_i32 : i32
    %1 = arith.extui %0 : i1 to i32
    %c0_i32_0 = arith.constant 0 : i32
    %2 = arith.cmpi ne, %1, %c0_i32_0 : i32
    scf.if %2 {
      %cst_39 = arith.constant 0.000000e+00 : f32
      %47 = vector.broadcast %cst_39 : f32 to vector<1x1x16x1xf32>
      %c0_40 = arith.constant 0 : index
      %c0_41 = arith.constant 0 : index
      %c0_42 = arith.constant 0 : index
      %c0_43 = arith.constant 0 : index
      %48 = vector.load %arg9[%c0_40, %c0_41, %c0_42, %c0_43] : memref<1x1x16x1xf32, #tpu.memory_space<vmem>>, vector<1x1x16x1xf32>
      tpu.vector_store %arg9[%c0_40, %c0_41, %c0_42, %c0_43], %47 {strides = array<i32>} : memref<1x1x16x1xf32, #tpu.memory_space<vmem>>, vector<1x1x16x1xf32>,
      %cst_44 = arith.constant 0.000000e+00 : f32
      %49 = vector.broadcast %cst_44 : f32 to vector<1x1x1x1xf32>
      %c0_45 = arith.constant 0 : index
      %c0_46 = arith.constant 0 : index
      %c0_47 = arith.constant 0 : index
      %c0_48 = arith.constant 0 : index
      %50 = vector.load %arg10[%c0_45, %c0_46, %c0_47, %c0_48] : memref<1x1x1x1xf32, #tpu.memory_space<vmem>>, vector<1x1x1x1xf32>
      tpu.vector_store %arg10[%c0_45, %c0_46, %c0_47, %c0_48], %49 {strides = array<i32>} : memref<1x1x1x1xf32, #tpu.memory_space<vmem>>, vector<1x1x1x1xf32>,
    } else {
    }
    %c0 = arith.constant 0 : index
    %c0_1 = arith.constant 0 : index
    %c0_2 = arith.constant 0 : index
    %3 = vector.load %arg3[%c0, %c0_1, %c0_2] : memref<1x8x64xf32, #tpu.memory_space<vmem>>, vector<1x8x64xf32>
    %4 = vector.shape_cast %3 : vector<1x8x64xf32> to vector<8x64xf32>
    %c0_3 = arith.constant 0 : index
    %c0_4 = arith.constant 0 : index
    %5 = vector.load %arg4[%c0_3, %c0_4] : memref<16x8xf32, #tpu.memory_space<vmem>>, vector<16x8xf32>
    %cst = arith.constant dense<0.000000e+00> : vector<16x64xf32>
    %6 = tpu.matmul %5, %4, %cst {dimension_numbers = #tpu.dot_dimension_numbers<[1], [0], [0], [1], [0, 0, 1, 1], [], []>} : vector<16x8xf32>, vector<8x64xf32>, vector<16x64xf32> -> vector<16x64xf32>
    %c0_5 = arith.constant 0 : index
    %c0_6 = arith.constant 0 : index
    %7 = vector.load %arg6[%c0_5, %c0_6] : memref<16x1xf32, #tpu.memory_space<vmem>>, vector<16x1xf32>
    %cst_7 = arith.constant 2.000000e+00 : f32
    %8 = vector.broadcast %cst_7 : f32 to vector<16x64xf32>
    %9 = arith.mulf %8, %6 : vector<16x64xf32>
    %10 = vector.broadcast %7 : vector<16x1xf32> to vector<16x64xf32>
    %11 = arith.subf %10, %9 : vector<16x64xf32>
    %12 = tpu.iota {dimensions = array<i32: 0>} : vector<16x64xi32>
    %cst_8 = arith.constant dense<0x7F800000> : vector<64xf32>
    %13 = vector.multi_reduction <minimumf>, %11, %cst_8 [0] : vector<16x64xf32> to vector<64xf32>
    %14 = vector.shape_cast %13 : vector<64xf32> to vector<1x64xf32>
    %15 = vector.broadcast %14 : vector<1x64xf32> to vector<16x64xf32>
    %16 = arith.cmpf oeq, %11, %15 : vector<16x64xf32>
    %c16_i32 = arith.constant 16 : i32
    %17 = vector.broadcast %c16_i32 : i32 to vector<16x64xi32>
    %18 = arith.select %16, %12, %17 : vector<16x64xi1>, vector<16x64xi32>
    %cst_9 = arith.constant dense<2147483647> : vector<64xi32>
    %19 = vector.multi_reduction <minsi>, %18, %cst_9 [0] : vector<16x64xi32> to vector<64xi32>
    %20 = vector.shape_cast %19 : vector<64xi32> to vector<1x64xi32>
    %21 = vector.broadcast %20 : vector<1x64xi32> to vector<16x64xi32>
    %22 = arith.cmpi eq, %12, %21 : vector<16x64xi32>
    %23 = arith.extui %22 : vector<16x64xi1> to vector<16x64xi32>
    %24 = arith.sitofp %23 : vector<16x64xi32> to vector<16x64xf32>
    %c0_10 = arith.constant 0 : index
    %c0_11 = arith.constant 0 : index
    %25 = vector.load %arg5[%c0_10, %c0_11] : memref<8x16xf32, #tpu.memory_space<vmem>>, vector<8x16xf32>
    %cst_12 = arith.constant dense<0.000000e+00> : vector<8x64xf32>
    %26 = tpu.matmul %25, %24, %cst_12 {dimension_numbers = #tpu.dot_dimension_numbers<[1], [0], [0], [1], [0, 0, 1, 1], [], []>} : vector<8x16xf32>, vector<16x64xf32>, vector<8x64xf32> -> vector<8x64xf32>
    %27 = vector.shape_cast %26 : vector<8x64xf32> to vector<1x8x64xf32>
    %c0_13 = arith.constant 0 : index
    %c0_14 = arith.constant 0 : index
    %c0_15 = arith.constant 0 : index
    %28 = vector.load %arg7[%c0_13, %c0_14, %c0_15] : memref<1x8x64xf32, #tpu.memory_space<vmem>>, vector<1x8x64xf32>
    tpu.vector_store %arg7[%c0_13, %c0_14, %c0_15], %27 {strides = array<i32>} : memref<1x8x64xf32, #tpu.memory_space<vmem>>, vector<1x8x64xf32>,
    %29 = vector.shape_cast %20 : vector<1x64xi32> to vector<1x1x1x64xi32>
    %c0_16 = arith.constant 0 : index
    %c0_17 = arith.constant 0 : index
    %c0_18 = arith.constant 0 : index
    %c0_19 = arith.constant 0 : index
    %30 = vector.load %arg8[%c0_16, %c0_17, %c0_18, %c0_19] : memref<1x1x1x64xi32, #tpu.memory_space<vmem>>, vector<1x1x1x64xi32>
    tpu.vector_store %arg8[%c0_16, %c0_17, %c0_18, %c0_19], %29 {strides = array<i32>} : memref<1x1x1x64xi32, #tpu.memory_space<vmem>>, vector<1x1x1x64xi32>,
    %31 = arith.subf %26, %4 : vector<8x64xf32>
    %32 = arith.mulf %31, %31 : vector<8x64xf32>
    %cst_20 = arith.constant dense<0.000000e+00> : vector<8xf32>
    %33 = vector.multi_reduction <add>, %32, %cst_20 [1] : vector<8x64xf32> to vector<8xf32>
    %34 = vector.shape_cast %33 : vector<8xf32> to vector<8x1xf32>
    %c0_21 = arith.constant 0 : index
    %c0_22 = arith.constant 0 : index
    %c0_23 = arith.constant 0 : index
    %c0_24 = arith.constant 0 : index
    %35 = vector.load %arg10[%c0_21, %c0_22, %c0_23, %c0_24] : memref<1x1x1x1xf32, #tpu.memory_space<vmem>>, vector<1x1x1x1xf32>
    %cst_25 = arith.constant dense<0.000000e+00> : vector<1xf32>
    %36 = vector.multi_reduction <add>, %34, %cst_25 [0] : vector<8x1xf32> to vector<1xf32>
    %37 = vector.shape_cast %36 : vector<1xf32> to vector<1x1xf32>
    %38 = vector.shape_cast %37 : vector<1x1xf32> to vector<1x1x1x1xf32>
    %39 = arith.addf %35, %38 : vector<1x1x1x1xf32>
    %c0_26 = arith.constant 0 : index
    %c0_27 = arith.constant 0 : index
    %c0_28 = arith.constant 0 : index
    %c0_29 = arith.constant 0 : index
    %40 = vector.load %arg10[%c0_26, %c0_27, %c0_28, %c0_29] : memref<1x1x1x1xf32, #tpu.memory_space<vmem>>, vector<1x1x1x1xf32>
    tpu.vector_store %arg10[%c0_26, %c0_27, %c0_28, %c0_29], %39 {strides = array<i32>} : memref<1x1x1x1xf32, #tpu.memory_space<vmem>>, vector<1x1x1x1xf32>,
    %c0_30 = arith.constant 0 : index
    %c0_31 = arith.constant 0 : index
    %c0_32 = arith.constant 0 : index
    %c0_33 = arith.constant 0 : index
    %41 = vector.load %arg9[%c0_30, %c0_31, %c0_32, %c0_33] : memref<1x1x16x1xf32, #tpu.memory_space<vmem>>, vector<1x1x16x1xf32>
    %cst_34 = arith.constant dense<0.000000e+00> : vector<16xf32>
    %42 = vector.multi_reduction <add>, %24, %cst_34 [1] : vector<16x64xf32> to vector<16xf32>
    %43 = vector.shape_cast %42 : vector<16xf32> to vector<16x1xf32>
    %44 = vector.shape_cast %43 : vector<16x1xf32> to vector<1x1x16x1xf32>
    %45 = arith.addf %41, %44 : vector<1x1x16x1xf32>
    %c0_35 = arith.constant 0 : index
    %c0_36 = arith.constant 0 : index
    %c0_37 = arith.constant 0 : index
    %c0_38 = arith.constant 0 : index
    %46 = vector.load %arg9[%c0_35, %c0_36, %c0_37, %c0_38] : memref<1x1x16x1xf32, #tpu.memory_space<vmem>>, vector<1x1x16x1xf32>
    tpu.vector_store %arg9[%c0_35, %c0_36, %c0_37, %c0_38], %45 {strides = array<i32>} : memref<1x1x16x1xf32, #tpu.memory_space<vmem>>, vector<1x1x16x1xf32>,
    return
  }
  func.func @transform_0(%arg0: i32, %arg1: i32, %arg2: i32) -> (i32, i32, i32) {
    %c1_i32 = arith.constant 1 : i32
    %0 = arith.muli %arg0, %c1_i32 : i32
    %1 = arith.addi %0, %arg2 : i32
    %c0_i32 = arith.constant 0 : i32
    %c0_i32_0 = arith.constant 0 : i32
    return %arg1, %c0_i32, %1 : i32, i32, i32
  }
  func.func @transform_1(%arg0: i32, %arg1: i32, %arg2: i32) -> (i32, i32) {
    %c0_i32 = arith.constant 0 : i32
    %c0_i32_0 = arith.constant 0 : i32
    %c0_i32_1 = arith.constant 0 : i32
    return %c0_i32, %c0_i32_0 : i32, i32
  }
  func.func @transform_2(%arg0: i32, %arg1: i32, %arg2: i32) -> (i32, i32) {
    %c0_i32 = arith.constant 0 : i32
    %c0_i32_0 = arith.constant 0 : i32
    %c0_i32_1 = arith.constant 0 : i32
    return %c0_i32, %c0_i32_0 : i32, i32
  }
  func.func @transform_3(%arg0: i32, %arg1: i32, %arg2: i32) -> (i32, i32) {
    %c0_i32 = arith.constant 0 : i32
    %c0_i32_0 = arith.constant 0 : i32
    %c0_i32_1 = arith.constant 0 : i32
    return %c0_i32, %c0_i32_0 : i32, i32
  }
  func.func @transform_4(%arg0: i32, %arg1: i32, %arg2: i32) -> (i32, i32, i32) {
    %c1_i32 = arith.constant 1 : i32
    %0 = arith.muli %arg0, %c1_i32 : i32
    %1 = arith.addi %0, %arg2 : i32
    %c0_i32 = arith.constant 0 : i32
    %c0_i32_0 = arith.constant 0 : i32
    return %arg1, %c0_i32, %1 : i32, i32, i32
  }
  func.func @transform_5(%arg0: i32, %arg1: i32, %arg2: i32) -> (i32, i32, i32, i32) {
    %c1_i32 = arith.constant 1 : i32
    %0 = arith.muli %arg0, %c1_i32 : i32
    %1 = arith.addi %0, %arg2 : i32
    %c0_i32 = arith.constant 0 : i32
    %c0_i32_0 = arith.constant 0 : i32
    %c0_i32_1 = arith.constant 0 : i32
    return %arg1, %1, %c0_i32, %c0_i32_0 : i32, i32, i32, i32
  }
  func.func @transform_6(%arg0: i32, %arg1: i32, %arg2: i32) -> (i32, i32, i32, i32) {
    %c0_i32 = arith.constant 0 : i32
    %c0_i32_0 = arith.constant 0 : i32
    %c0_i32_1 = arith.constant 0 : i32
    return %arg0, %arg1, %c0_i32, %c0_i32_0 : i32, i32, i32, i32
  }
  func.func @transform_7(%arg0: i32, %arg1: i32, %arg2: i32) -> (i32, i32, i32, i32) {
    %c0_i32 = arith.constant 0 : i32
    %c0_i32_0 = arith.constant 0 : i32
    %c0_i32_1 = arith.constant 0 : i32
    return %arg0, %arg1, %c0_i32, %c0_i32_0 : i32, i32, i32, i32
  }
}

</mosaic_0001>

<llo_original>
// kernel: vector_quantizer_ema_forward.1
$region0: #{vector_quantizer_ema_forward.1}
  #allocation0 [shape = 'u32[]', space=smem, size = 0x4, offset = 0x4, fixed_abs, tag = 'smem constant byte address 0x4 - core index']
  #allocation1 [shape = 'u32[144,128]{1,0:T(1,128)}', space=vmem, size = 0x12000, scoped, tag = 'internal scratch']
  %s0 = inlined_call_operand.vmem [shape: f32[2,8,64], index: 0, kind: input, shape index: {}]
  %s1 = inlined_call_operand.vmem [shape: f32[16,8], index: 1, kind: input, shape index: {}]
  %s2 = inlined_call_operand.vmem [shape: f32[8,16], index: 2, kind: input, shape index: {}]
  %s3 = inlined_call_operand.vmem [shape: f32[16,1], index: 3, kind: input, shape index: {}]
  %s4 = inlined_call_operand.vmem [shape: f32[2,8,64], index: 4, kind: output, shape index: {0}]
  %s5 = inlined_call_operand.vmem [shape: s32[2,1,1,64], index: 5, kind: output, shape index: {1}]
  %s6 = inlined_call_operand.vmem [shape: f32[1,2,16,1], index: 6, kind: output, shape index: {2}]
  %s7 = inlined_call_operand.vmem [shape: f32[1,2,1,1], index: 7, kind: output, shape index: {3}]
  %8 = xla_tuple %s4, %s5, %s6, %s7
  %s9 = sld [smem:[#allocation0]]
  $region77: #{vector_quantizer_ema_forward.1} parent=0
    _
  %s11 = ssub.s32 1, %s9
  %s12 = scalar_select 0, %s11, %s9
  loop: start=0, step=1, limit=4
  $region2: #{vector_quantizer_ema_forward.1} parent=0 // loop_pre_header
    _
  $region3: #{vector_quantizer_ema_forward.1} parent=0 // loop_header
    %s14 = sphi 0, %s18
    %p15 = scmp.ge.s32.totalorder %s14, 4
    %s21 = sphi 0, %s40
    %s22 = sphi 0, %s36
    %s23 = sphi 0, %s32
    %s24 = sphi 0, %s21
    %s25 = sphi 0, %s22
    %s26 = sphi 0, %s23
    %s27 = sphi 0, %s24
    %s28 = sphi 0, %s25
    %s29 = sphi 0, %s26
    %s47 = sphi 0, %s49
    %s50 = sphi 0, %s47
    %s51 = sphi 0, %s50
    %s67 = sphi 0, %s51
    %s71 = sphi 0, %s71
    %s73 = sphi 0, %s71
    %s74 = sphi 0, %s73
    %s88 = sphi 0, %s74
    %s92 = sphi 0, %s92
    %s94 = sphi 0, %s92
    %s95 = sphi 0, %s94
    %s109 = sphi 0, %s95
    %s113 = sphi 0, %s113
    %s115 = sphi 0, %s113
    %s116 = sphi 0, %s115
    %s130 = sphi 0, %s116
    %s140 = sphi 0, %s142
    %s143 = sphi 0, %s140
    %s144 = sphi 0, %s143
    %s160 = sphi 0, %s144
    %s170 = sphi 0, %s172
    %s173 = sphi 0, %s170
    %s174 = sphi 0, %s173
    %s190 = sphi 0, %s174
    %s198 = sphi 0, %s200
    %s201 = sphi 0, %s198
    %s202 = sphi 0, %s201
    %s218 = sphi 0, %s202
    %s226 = sphi 0, %s228
    %s229 = sphi 0, %s226
    %s230 = sphi 0, %s229
    %s246 = sphi 0, %s230
  $region4: #{vector_quantizer_ema_forward.1} parent=0 // loop_header_branch
    %17 = sbr.rel (%p15) target = $region8
  $region5: #{vector_quantizer_ema_forward.1} parent=0 // loop_body
    %s19 = ssub.s32 %s14, 1
    %s20 = ssub.s32 %s14, 2
    %s30 = sadd.s32 1, %s23
    %p31 = scmp.ge.s32.totalorder %s30, 1
    %s32 = scalar_select %p31, 0, %s30
    %s33 = sadd.s32 1, %s22
    %s34 = scalar_select %p31, %s33, %s22
    %p35 = scmp.ge.s32.totalorder %s34, 2
    %s36 = scalar_select %p35, 0, %s34
    %s37 = sadd.s32 1, %s21
    %s38 = scalar_select %p35, %s37, %s21
    %p39 = scmp.ge.s32.totalorder %s38, 1
    %s40 = scalar_select %p39, 0, %s38
    %s41 = sadd.s32 %s21, %s23
    %s42 = sadd.s32 %s40, %s32
    %s43 = ssub.s32 %s22, %s36
    %s44 = ssub.s32 %s41, %s42
    %s45 = sor.u32 %s43, %s44
    %p46 = scmp.eq.s32.totalorder %s45, 0
    %s48 = sadd.s32 %s47, 1
    %s49 = scalar_select %p46, %s47, %s48
    %p52 = pneg %p46
    %p53 = scmp.eq.s32.totalorder %s14, 1
    %p54 = por %p52, %p53
    %p55 = scmp.ne.s32.totalorder %s47, %s50
    %p56 = scmp.eq.s32.totalorder %s14, 0
    %p57 = por %p55, %p56
    %p58 = scmp.ne.s32.totalorder %s47, %s50
    %p59 = scmp.eq.s32.totalorder %s19, 1
    %p60 = por %p58, %p59
    %p61 = scmp.ne.s32.totalorder %s50, %s51
    %p62 = scmp.eq.s32.totalorder %s19, 0
    %p63 = por %p61, %p62
    %p64 = scmp.ne.s32.totalorder %s50, %s51
    %p65 = scmp.eq.s32.totalorder %s20, 1
    %p66 = por %p64, %p65
    %p68 = scmp.ne.s32.totalorder %s51, %s67
    %p69 = scmp.eq.s32.totalorder %s20, 0
    %p70 = por %p68, %p69
    %s72 = sadd.s32 %s71, 1
    %p75 = scmp.eq.s32.totalorder %s14, 1
    %p76 = scmp.ne.s32.totalorder %s71, %s73
    %p77 = scmp.eq.s32.totalorder %s14, 0
    %p78 = por %p76, %p77
    %p79 = scmp.ne.s32.totalorder %s71, %s73
    %p80 = scmp.eq.s32.totalorder %s19, 1
    %p81 = por %p79, %p80
    %p82 = scmp.ne.s32.totalorder %s73, %s74
    %p83 = scmp.eq.s32.totalorder %s19, 0
    %p84 = por %p82, %p83
    %p85 = scmp.ne.s32.totalorder %s73, %s74
    %p86 = scmp.eq.s32.totalorder %s20, 1
    %p87 = por %p85, %p86
    %p89 = scmp.ne.s32.totalorder %s74, %s88
    %p90 = scmp.eq.s32.totalorder %s20, 0
    %p91 = por %p89, %p90
    %s93 = sadd.s32 %s92, 1
    %p96 = scmp.eq.s32.totalorder %s14, 1
    %p97 = scmp.ne.s32.totalorder %s92, %s94
    %p98 = scmp.eq.s32.totalorder %s14, 0
    %p99 = por %p97, %p98
    %p100 = scmp.ne.s32.totalorder %s92, %s94
    %p101 = scmp.eq.s32.totalorder %s19, 1
    %p102 = por %p100, %p101
    %p103 = scmp.ne.s32.totalorder %s94, %s95
    %p104 = scmp.eq.s32.totalorder %s19, 0
    %p105 = por %p103, %p104
    %p106 = scmp.ne.s32.totalorder %s94, %s95
    %p107 = scmp.eq.s32.totalorder %s20, 1
    %p108 = por %p106, %p107
    %p110 = scmp.ne.s32.totalorder %s95, %s109
    %p111 = scmp.eq.s32.totalorder %s20, 0
    %p112 = por %p110, %p111
    %s114 = sadd.s32 %s113, 1
    %p117 = scmp.eq.s32.totalorder %s14, 1
    %p118 = scmp.ne.s32.totalorder %s113, %s115
    %p119 = scmp.eq.s32.totalorder %s14, 0
    %p120 = por %p118, %p119
    %p121 = scmp.ne.s32.totalorder %s113, %s115
    %p122 = scmp.eq.s32.totalorder %s19, 1
    %p123 = por %p121, %p122
    %p124 = scmp.ne.s32.totalorder %s115, %s116
    %p125 = scmp.eq.s32.totalorder %s19, 0
    %p126 = por %p124, %p125
    %p127 = scmp.ne.s32.totalorder %s115, %s116
    %p128 = scmp.eq.s32.totalorder %s20, 1
    %p129 = por %p127, %p128
    %p131 = scmp.ne.s32.totalorder %s116, %s130
    %p132 = scmp.eq.s32.totalorder %s20, 0
    %p133 = por %p131, %p132
    %s134 = sadd.s32 %s21, %s23
    %s135 = sadd.s32 %s40, %s32
    %s136 = ssub.s32 %s22, %s36
    %s137 = ssub.s32 %s134, %s135
    %s138 = sor.u32 %s136, %s137
    %p139 = scmp.eq.s32.totalorder %s138, 0
    %s141 = sadd.s32 %s140, 1
    %s142 = scalar_select %p139, %s140, %s141
    %p145 = pneg %p139
    %p146 = scmp.eq.s32.totalorder %s14, 1
    %p147 = por %p145, %p146
    %p148 = scmp.ne.s32.totalorder %s140, %s143
    %p149 = scmp.eq.s32.totalorder %s14, 0
    %p150 = por %p148, %p149
    %p151 = scmp.ne.s32.totalorder %s140, %s143
    %p152 = scmp.eq.s32.totalorder %s19, 1
    %p153 = por %p151, %p152
    %p154 = scmp.ne.s32.totalorder %s143, %s144
    %p155 = scmp.eq.s32.totalorder %s19, 0
    %p156 = por %p154, %p155
    %p157 = scmp.ne.s32.totalorder %s143, %s144
    %p158 = scmp.eq.s32.totalorder %s20, 1
    %p159 = por %p157, %p158
    %p161 = scmp.ne.s32.totalorder %s144, %s160
    %p162 = scmp.eq.s32.totalorder %s20, 0
    %p163 = por %p161, %p162
    %s164 = sadd.s32 %s21, %s23
    %s165 = sadd.s32 %s40, %s32
    %s166 = ssub.s32 %s22, %s36
    %s167 = ssub.s32 %s164, %s165
    %s168 = sor.u32 %s166, %s167
    %p169 = scmp.eq.s32.totalorder %s168, 0
    %s171 = sadd.s32 %s170, 1
    %s172 = scalar_select %p169, %s170, %s171
    %p175 = pneg %p169
    %p176 = scmp.eq.s32.totalorder %s14, 1
    %p177 = por %p175, %p176
    %p178 = scmp.ne.s32.totalorder %s170, %s173
    %p179 = scmp.eq.s32.totalorder %s14, 0
    %p180 = por %p178, %p179
    %p181 = scmp.ne.s32.totalorder %s170, %s173
    %p182 = scmp.eq.s32.totalorder %s19, 1
    %p183 = por %p181, %p182
    %p184 = scmp.ne.s32.totalorder %s173, %s174
    %p185 = scmp.eq.s32.totalorder %s19, 0
    %p186 = por %p184, %p185
    %p187 = scmp.ne.s32.totalorder %s173, %s174
    %p188 = scmp.eq.s32.totalorder %s20, 1
    %p189 = por %p187, %p188
    %p191 = scmp.ne.s32.totalorder %s174, %s190
    %p192 = scmp.eq.s32.totalorder %s20, 0
    %p193 = por %p191, %p192
    %s194 = ssub.s32 %s21, %s40
    %s195 = ssub.s32 %s22, %s36
    %s196 = sor.u32 %s194, %s195
    %p197 = scmp.eq.s32.totalorder %s196, 0
    %s199 = sadd.s32 %s198, 1
    %s200 = scalar_select %p197, %s198, %s199
    %p203 = pneg %p197
    %p204 = scmp.eq.s32.totalorder %s14, 1
    %p205 = por %p203, %p204
    %p206 = scmp.ne.s32.totalorder %s198, %s201
    %p207 = scmp.eq.s32.totalorder %s14, 0
    %p208 = por %p206, %p207
    %p209 = scmp.ne.s32.totalorder %s198, %s201
    %p210 = scmp.eq.s32.totalorder %s19, 1
    %p211 = por %p209, %p210
    %p212 = scmp.ne.s32.totalorder %s201, %s202
    %p213 = scmp.eq.s32.totalorder %s19, 0
    %p214 = por %p212, %p213
    %p215 = scmp.ne.s32.totalorder %s201, %s202
    %p216 = scmp.eq.s32.totalorder %s20, 1
    %p217 = por %p215, %p216
    %p219 = scmp.ne.s32.totalorder %s202, %s218
    %p220 = scmp.eq.s32.totalorder %s20, 0
    %p221 = por %p219, %p220
    %s222 = ssub.s32 %s21, %s40
    %s223 = ssub.s32 %s22, %s36
    %s224 = sor.u32 %s222, %s223
    %p225 = scmp.eq.s32.totalorder %s224, 0
    %s227 = sadd.s32 %s226, 1
    %s228 = scalar_select %p225, %s226, %s227
    %p231 = pneg %p225
    %p232 = scmp.eq.s32.totalorder %s14, 1
    %p233 = por %p231, %p232
    %p234 = scmp.ne.s32.totalorder %s226, %s229
    %p235 = scmp.eq.s32.totalorder %s14, 0
    %p236 = por %p234, %p235
    %p237 = scmp.ne.s32.totalorder %s226, %s229
    %p238 = scmp.eq.s32.totalorder %s19, 1
    %p239 = por %p237, %p238
    %p240 = scmp.ne.s32.totalorder %s229, %s230
    %p241 = scmp.eq.s32.totalorder %s19, 0
    %p242 = por %p240, %p241
    %p243 = scmp.ne.s32.totalorder %s229, %s230
    %p244 = scmp.eq.s32.totalorder %s20, 1
    %p245 = por %p243, %p244
    %p247 = scmp.ne.s32.totalorder %s230, %s246
    %p248 = scmp.eq.s32.totalorder %s20, 0
    %p249 = por %p247, %p248
    %p250 = scmp.le.s32.totalorder 1, %s14
    %p251 = scmp.lt.s32.totalorder %s14, 3
    %p252 = pnand %p250, %p251
    %p253 = pneg %p252
    // Predicated region
    $region9: #{vector_quantizer_ema_forward.1} parent=5 // pred_check
      _
    $region10: #{vector_quantizer_ema_forward.1} parent=5 // pred_check_branch
      %255 = sbr.rel (%p252) target = $region12
    $region11: #{vector_quantizer_ema_forward.1} parent=5 // pred_region
      %s256 = ssub.s32 %s14, 1
      // Predicated region
      $region13: #{vector_quantizer_ema_forward.1} parent=11 // pred_check
        %p257 = pneg %p84
      $region14: #{vector_quantizer_ema_forward.1} parent=11 // pred_check_branch
        %259 = sbr.rel (%p257) target = $region16
      $region15: #{vector_quantizer_ema_forward.1} parent=11 // pred_region
        _
      $region16: #{vector_quantizer_ema_forward.1} parent=11 // pred_fallthru
        _
      // Predicated region
      $region17: #{vector_quantizer_ema_forward.1} parent=11 // pred_check
        %p260 = pneg %p105
      $region18: #{vector_quantizer_ema_forward.1} parent=11 // pred_check_branch
        %262 = sbr.rel (%p260) target = $region20
      $region19: #{vector_quantizer_ema_forward.1} parent=11 // pred_region
        _
      $region20: #{vector_quantizer_ema_forward.1} parent=11 // pred_fallthru
        _
      // Predicated region
      $region21: #{vector_quantizer_ema_forward.1} parent=11 // pred_check
        %p263 = pneg %p126
      $region22: #{vector_quantizer_ema_forward.1} parent=11 // pred_check_branch
        %265 = sbr.rel (%p263) target = $region24
      $region23: #{vector_quantizer_ema_forward.1} parent=11 // pred_region
        _
      $region24: #{vector_quantizer_ema_forward.1} parent=11 // pred_fallthru
        _
    $region12: #{vector_quantizer_ema_forward.1} parent=5 // pred_fallthru
      _
    %p266 = scmp.lt.s32.totalorder %s14, 2
    // Predicated region
    $region25: #{vector_quantizer_ema_forward.1} parent=5 // pred_check
      %p267 = pneg %p266
    $region26: #{vector_quantizer_ema_forward.1} parent=5 // pred_check_branch
      %269 = sbr.rel (%p267) target = $region28
    $region27: #{vector_quantizer_ema_forward.1} parent=5 // pred_region
      // Predicated region
      $region29: #{vector_quantizer_ema_forward.1} parent=27 // pred_check
        %p270 = pneg %p57
      $region30: #{vector_quantizer_ema_forward.1} parent=27 // pred_check_branch
        %272 = sbr.rel (%p270) target = $region32
      $region31: #{vector_quantizer_ema_forward.1} parent=27 // pred_region
        %s273 = sadd.s32 %s21, %s23
        %p274 = scmp.lt.s32.totalorder %s22, 1
        %s275 = scalar_select %p274, %s22, 1
        %p276 = scmp.lt.s32.totalorder %s273, 0
        %s277 = scalar_select %p276, %s273, 0
        %s278 = sadd.s32 %s277, %s275
        %s279 = smul.addr %s278, 8
        %s280 = scalar_lea.vmem %s0, %s279
        %s281 = sadd.s32 %s21, %s23
      $region32: #{vector_quantizer_ema_forward.1} parent=27 // pred_fallthru
        _
    $region28: #{vector_quantizer_ema_forward.1} parent=5 // pred_fallthru
      _
    %p282 = scmp.le.s32.totalorder 1, %s14
    %p283 = scmp.lt.s32.totalorder %s14, 3
    %p284 = pnand %p282, %p283
    %p285 = pneg %p284
    // Predicated region
    $region33: #{vector_quantizer_ema_forward.1} parent=5 // pred_check
      _
    $region34: #{vector_quantizer_ema_forward.1} parent=5 // pred_check_branch
      %287 = sbr.rel (%p284) target = $region36
    $region35: #{vector_quantizer_ema_forward.1} parent=5 // pred_region
      %s288 = ssub.s32 %s14, 1
      %s289 = sadd.s32 %s24, %s26
      %p290 = scmp.lt.s32.totalorder %s25, 1
      %s291 = scalar_select %p290, %s25, 1
      %p292 = scmp.lt.s32.totalorder %s289, 0
      %s293 = scalar_select %p292, %s289, 0
      %s294 = sadd.s32 %s293, %s291
      %s295 = smul.addr %s294, 8
      %s296 = scalar_lea.vmem %s0, %s295
      %p297 = pneg %p63
      %p298 = pneg %p60
      %p299 = pneg %p84
      %p300 = pneg %p81
      %p301 = pneg %p105
      %p302 = pneg %p102
      %p303 = pneg %p126
      %p304 = pneg %p123
      %p305 = pneg %p156
      %p306 = pneg %p153
      %s307 = sadd.s32 %s24, %s26
      %p308 = scmp.lt.s32.totalorder %s25, 1
      %s309 = scalar_select %p308, %s25, 1
      %p310 = scmp.lt.s32.totalorder %s307, 0
      %s311 = scalar_select %p310, %s307, 0
      %s312 = sadd.s32 %s311, %s309
      %s313 = smul.addr %s312, 8
      %s314 = scalar_lea.vmem %s4, %s313
      %p315 = pneg %p186
      %p316 = pneg %p183
      %s317 = sadd.s32 %s24, %s26
      %p318 = scmp.lt.s32.totalorder %s25, 1
      %s319 = scalar_select %p318, %s25, 1
      %p320 = scmp.lt.s32.totalorder %s317, 0
      %s321 = scalar_select %p320, %s317, 0
      %s322 = sadd.s32 %s321, %s319
      %s323 = scalar_lea.vmem %s5, %s322
      %p324 = pneg %p214
      %p325 = pneg %p211
      %p326 = scmp.lt.s32.totalorder %s24, 0
      %s327 = scalar_select %p326, %s24, 0
      %p328 = scmp.lt.s32.totalorder %s25, 1
      %s329 = scalar_select %p328, %s25, 1
      %s330 = smul.addr %s329, 2
      %s331 = smul.addr %s327, 4
      %s332 = sadd.s32 %s330, %s331
      %s333 = smul.addr %s332, 8
      %s334 = scalar_lea.vmem %s6, %s333
      %p335 = pneg %p242
      %p336 = pneg %p239
      %p337 = scmp.lt.s32.totalorder %s24, 0
      %s338 = scalar_select %p337, %s24, 0
      %p339 = scmp.lt.s32.totalorder %s25, 1
      %s340 = scalar_select %p339, %s25, 1
      %s341 = smul.addr %s338, 2
      %s342 = sadd.s32 %s340, %s341
      %s343 = scalar_lea.vmem %s7, %s342
      %s344 = sadd.s32 %s24, %s26
      %p345 = scmp.lt.s32.totalorder %s25, 1
      %s346 = scalar_select %p345, %s25, 1
      %p347 = scmp.lt.s32.totalorder %s344, 0
      %s348 = scalar_select %p347, %s344, 0
      %s349 = sadd.s32 %s348, %s346
      %s350 = smul.addr %s349, 8
      %s351 = scalar_lea.vmem %s0, %s350
      %s352 = sadd.s32 %s24, %s26
      %s353 = sadd.s32 %s24, %s26
      %p354 = scmp.lt.s32.totalorder %s25, 1
      %s355 = scalar_select %p354, %s25, 1
      %p356 = scmp.lt.s32.totalorder %s353, 0
      %s357 = scalar_select %p356, %s353, 0
      %s358 = sadd.s32 %s357, %s355
      %s359 = smul.addr %s358, 8
      %s360 = scalar_lea.vmem %s4, %s359
      %s361 = sadd.s32 %s24, %s26
      %s362 = sadd.s32 %s24, %s26
      %p363 = scmp.lt.s32.totalorder %s25, 1
      %s364 = scalar_select %p363, %s25, 1
      %p365 = scmp.lt.s32.totalorder %s362, 0
      %s366 = scalar_select %p365, %s362, 0
      %s367 = sadd.s32 %s366, %s364
      %s368 = scalar_lea.vmem %s5, %s367
      %s369 = sadd.s32 %s24, %s26
      %p370 = scmp.lt.s32.totalorder %s24, 0
      %s371 = scalar_select %p370, %s24, 0
      %p372 = scmp.lt.s32.totalorder %s25, 1
      %s373 = scalar_select %p372, %s25, 1
      %s374 = smul.addr %s373, 2
      %s375 = smul.addr %s371, 4
      %s376 = sadd.s32 %s374, %s375
      %s377 = smul.addr %s376, 8
      %s378 = scalar_lea.vmem %s6, %s377
      %p379 = scmp.lt.s32.totalorder %s24, 0
      %s380 = scalar_select %p379, %s24, 0
      %p381 = scmp.lt.s32.totalorder %s25, 1
      %s382 = scalar_select %p381, %s25, 1
      %s383 = smul.addr %s380, 2
      %s384 = sadd.s32 %s382, %s383
      %s385 = scalar_lea.vmem %s7, %s384
      %p386 = scmp.eq.s32.totalorder %s26, 0
      // Predicated region
      $region37: #{vector_quantizer_ema_forward.1} parent=35 // pred_check
        %p387 = pneg %p386
      $region38: #{vector_quantizer_ema_forward.1} parent=35 // pred_check_branch
        %389 = sbr.rel (%p387) target = $region40
      $region39: #{vector_quantizer_ema_forward.1} parent=35 // pred_region
        %vm390 = vcmask 7168
        %391 = vst.msk [vmem:[%s378] sm:$0xff] %vm390, 0.0
        %392 = vst.msk [vmem:[%s378 + $0x8] sm:$0xff] %vm390, 0.0
        %vm393 = vcmask 0
        %394 = vst.msk [vmem:[%s385] sm:$0x1] %vm393, 0.0
      $region40: #{vector_quantizer_ema_forward.1} parent=35 // pred_fallthru
        _
      %v395 = vld [vmem:[%s351] sm:$0xff]
      %v396 = vld [vmem:[%s1] sm:$0xff]
      %v397 = vld [vmem:[%s1 + $0x8] sm:$0xff]
      %vm398 = vcmask 64512
      %v400 = vsel %vm398, %v396, 0
      %v403 = vsel %vm398, %v397, 0
      %405 = vmatprep.subr.mxu0 0.0
      %406 = vmatpush1.msra.mxu0 0.0
      %407 = vmatprep.subr.mxu0 0.0
      %408 = vmatpush1.msra.mxu0 0.0
      %409 = vmatprep.subr.mxu0 0.0
      %410 = vmatpush1.msra.mxu0 0.0
      %411 = vmatprep.subr.mxu0 0.0
      %412 = vmatpush1.msra.mxu0 0.0
      %413 = vmatprep.subr.mxu0 0.0
      %414 = vmatpush1.msra.mxu0 0.0
      %415 = vmatprep.subr.mxu0 0.0
      %416 = vmatpush1.msra.mxu0 0.0
      %417 = vmatprep.subr.mxu0 0.0
      %418 = vmatpush1.msra.mxu0 0.0
      %419 = vmatprep.subr.mxu0 0.0
      %420 = vmatpush1.msra.mxu0 0.0
      %421 = vmatprep.subr.mxu0 0.0
      %422 = vmatpush1.msra.mxu0 0.0
      %423 = vmatprep.subr.mxu0 0.0
      %424 = vmatpush1.msra.mxu0 0.0
      %425 = vmatprep.subr.mxu0 0.0
      %426 = vmatpush1.msra.mxu0 0.0
      %427 = vmatprep.subr.mxu0 0.0
      %428 = vmatpush1.msra.mxu0 0.0
      %429 = vmatprep.subr.mxu0 0.0
      %430 = vmatpush1.msra.mxu0 0.0
      %431 = vmatprep.subr.mxu0 0.0
      %432 = vmatpush1.msra.mxu0 0.0
      %433 = vmatprep.subr.mxu0 0.0
      %434 = vmatpush1.msra.mxu0 0.0
      %435 = vmatprep.subr.mxu0 0.0
      %436 = vmatpush1.msra.mxu0 %v395
      %437 = vmatprep.subr.mxu0 0.0
      %438 = vmatpush2.msra.mxu0 0.0
      %439 = vmatprep.subr.mxu0 0.0
      %440 = vmatpush2.msra.mxu0 0.0
      %441 = vmatprep.subr.mxu0 0.0
      %442 = vmatpush2.msra.mxu0 0.0
      %443 = vmatprep.subr.mxu0 0.0
      %444 = vmatpush2.msra.mxu0 0.0
      %445 = vmatprep.subr.mxu0 0.0
      %446 = vmatpush2.msra.mxu0 0.0
      %447 = vmatprep.subr.mxu0 0.0
      %448 = vmatpush2.msra.mxu0 0.0
      %449 = vmatprep.subr.mxu0 0.0
      %450 = vmatpush2.msra.mxu0 0.0
      %451 = vmatprep.subr.mxu0 0.0
      %452 = vmatpush2.msra.mxu0 0.0
      %453 = vmatprep.subr.mxu0 0.0
      %454 = vmatpush2.msra.mxu0 0.0
      %455 = vmatprep.subr.mxu0 0.0
      %456 = vmatpush2.msra.mxu0 0.0
      %457 = vmatprep.subr.mxu0 0.0
      %458 = vmatpush2.msra.mxu0 0.0
      %459 = vmatprep.subr.mxu0 0.0
      %460 = vmatpush2.msra.mxu0 0.0
      %461 = vmatprep.subr.mxu0 0.0
      %462 = vmatpush2.msra.mxu0 0.0
      %463 = vmatprep.subr.mxu0 0.0
      %464 = vmatpush2.msra.mxu0 0.0
      %465 = vmatprep.subr.mxu0 0.0
      %466 = vmatpush2.msra.mxu0 0.0
      %467 = vmatprep.subr.mxu0 0.0
      %468 = vmatpush2.msra.mxu0 0.0
      %469 = vmatprep.mubr.f32.mxu0 0.0
      %470 = vmatmul.mubr.f32.gmra.mxu0 %v400
      %v471 = vpop.f32.mrf.mxu0
      %v472 = vadd.f32 0.0, %v471
      %v473 = vpop.f32.mrf.mxu0
      %474 = vmatprep.mubr.f32.mxu0 0.0
      %475 = vmatmul.mubr.f32.gmra.mxu0 %v403
      %v476 = vpop.f32.mrf.mxu0
      %v477 = vadd.f32 0.0, %v476
      %v478 = vpop.f32.mrf.mxu0
      %479 = vdwg.mxu0
      %v480 = vld [vmem:[%s3] sm:$0xff]
      %v481 = vld [vmem:[%s3 + $0x8] sm:$0xff]
      %v482 = vmul.f32 %v472, 2.0
      %v483 = vmul.f32 %v477, 2.0
      %485 = vset.pattern.permute.xlu0 0
      %486 = vperm.xlu0 %485, %v480
      %v487 = vpop.permute.xlu0 %486
      %490 = vset.pattern.permute.xlu0 0
      %491 = vperm.xlu0 %490, %v481
      %v492 = vpop.permute.xlu0 %491
      %v494 = vsub.f32 %v487, %v482
      %v495 = vsub.f32 %v492, %v483
      %v496 = vlaneseq
      %v497 = vshrl.u32 %v496, 7
      %v498 = vadd.s32 %v497, 8
      %vm499 = vcmask 523264
      %v500 = vsel %vm499, %v494, inf
      %v501 = vsel %vm499, %v495, inf
      %v502 = vmin.f32 %v500, %v501
      %v503 = vrot.slane %v502, 4
      %v504 = vmin.f32 %v502, %v503
      %v505 = vrot.slane %v504, 2
      %v506 = vmin.f32 %v504, %v505
      %v507 = vrot.slane %v506, 1
      %v508 = vmin.f32 %v506, %v507
      %vm509 = vcmp.eq.f32.partialorder %v494, %v508
      %vm510 = vcmp.eq.f32.partialorder %v495, %v508
      %v511 = vsel %vm509, %v497, 16
      %v512 = vsel %vm510, %v498, 16
      %v513 = vsel %vm499, %v511, 2147483647
      %v514 = vsel %vm499, %v512, 2147483647
      %vm515 = vcmp.lt.s32.totalorder %v513, %v514
      %v516 = vsel %vm515, %v513, %v514
      %v517 = vrot.slane %v516, 4
      %vm518 = vcmp.lt.s32.totalorder %v516, %v517
      %v519 = vsel %vm518, %v516, %v517
      %v520 = vrot.slane %v519, 2
      %vm521 = vcmp.lt.s32.totalorder %v519, %v520
      %v522 = vsel %vm521, %v519, %v520
      %v523 = vrot.slane %v522, 1
      %vm524 = vcmp.lt.s32.totalorder %v522, %v523
      %v525 = vsel %vm524, %v522, %v523
      %vm526 = vcmp.eq.s32.totalorder %v497, %v525
      %vm527 = vcmp.eq.s32.totalorder %v498, %v525
      %v528 = vsel %vm526, 1, 0
      %v529 = vsel %vm527, 1, 0
      %v530 = vcvt.s32.f32 %v528
      %v531 = vcvt.s32.f32 %v529
      %v532 = vld [vmem:[%s2] sm:$0xff]
      %vm533 = vcmask 130048
      %v535 = vsel %vm533, %v532, 0
      %537 = vmatprep.subr.mxu0 0.0
      %538 = vmatpush1.msra.mxu0 0.0
      %539 = vmatprep.subr.mxu0 0.0
      %540 = vmatpush1.msra.mxu0 0.0
      %541 = vmatprep.subr.mxu0 0.0
      %542 = vmatpush1.msra.mxu0 0.0
      %543 = vmatprep.subr.mxu0 0.0
      %544 = vmatpush1.msra.mxu0 0.0
      %545 = vmatprep.subr.mxu0 0.0
      %546 = vmatpush1.msra.mxu0 0.0
      %547 = vmatprep.subr.mxu0 0.0
      %548 = vmatpush1.msra.mxu0 0.0
      %549 = vmatprep.subr.mxu0 0.0
      %550 = vmatpush1.msra.mxu0 0.0
      %551 = vmatprep.subr.mxu0 0.0
      %552 = vmatpush1.msra.mxu0 0.0
      %553 = vmatprep.subr.mxu0 0.0
      %554 = vmatpush1.msra.mxu0 0.0
      %555 = vmatprep.subr.mxu0 0.0
      %556 = vmatpush1.msra.mxu0 0.0
      %557 = vmatprep.subr.mxu0 0.0
      %558 = vmatpush1.msra.mxu0 0.0
      %559 = vmatprep.subr.mxu0 0.0
      %560 = vmatpush1.msra.mxu0 0.0
      %561 = vmatprep.subr.mxu0 0.0
      %562 = vmatpush1.msra.mxu0 0.0
      %563 = vmatprep.subr.mxu0 0.0
      %564 = vmatpush1.msra.mxu0 0.0
      %565 = vmatprep.subr.mxu0 0.0
      %566 = vmatpush1.msra.mxu0 %v531
      %567 = vmatprep.subr.mxu0 0.0
      %568 = vmatpush1.msra.mxu0 %v530
      %569 = vmatprep.subr.mxu0 0.0
      %570 = vmatpush2.msra.mxu0 0.0
      %571 = vmatprep.subr.mxu0 0.0
      %572 = vmatpush2.msra.mxu0 0.0
      %573 = vmatprep.subr.mxu0 0.0
      %574 = vmatpush2.msra.mxu0 0.0
      %575 = vmatprep.subr.mxu0 0.0
      %576 = vmatpush2.msra.mxu0 0.0
      %577 = vmatprep.subr.mxu0 0.0
      %578 = vmatpush2.msra.mxu0 0.0
      %579 = vmatprep.subr.mxu0 0.0
      %580 = vmatpush2.msra.mxu0 0.0
      %581 = vmatprep.subr.mxu0 0.0
      %582 = vmatpush2.msra.mxu0 0.0
      %583 = vmatprep.subr.mxu0 0.0
      %584 = vmatpush2.msra.mxu0 0.0
      %585 = vmatprep.subr.mxu0 0.0
      %586 = vmatpush2.msra.mxu0 0.0
      %587 = vmatprep.subr.mxu0 0.0
      %588 = vmatpush2.msra.mxu0 0.0
      %589 = vmatprep.subr.mxu0 0.0
      %590 = vmatpush2.msra.mxu0 0.0
      %591 = vmatprep.subr.mxu0 0.0
      %592 = vmatpush2.msra.mxu0 0.0
      %593 = vmatprep.subr.mxu0 0.0
      %594 = vmatpush2.msra.mxu0 0.0
      %595 = vmatprep.subr.mxu0 0.0
      %596 = vmatpush2.msra.mxu0 0.0
      %597 = vmatprep.subr.mxu0 0.0
      %598 = vmatpush2.msra.mxu0 0.0
      %599 = vmatprep.subr.mxu0 0.0
      %600 = vmatpush2.msra.mxu0 0.0
      %601 = vmatprep.mubr.f32.mxu0 0.0
      %602 = vmatmul.mubr.f32.gmra.mxu0 %v535
      %v603 = vpop.f32.mrf.mxu0
      %v604 = vadd.f32 0.0, %v603
      %v605 = vpop.f32.mrf.mxu0
      %606 = vdwg.mxu0
      %607 = vst.msk [vmem:[%s360] sm:$0xff] %vm499, %v604
      %vm608 = vcmask 516096
      %609 = vst.msk [vmem:[%s368] sm:$0x1] %vm608, %v525
      %v610 = vsub.f32 %v604, %v395
      %v611 = vmul.f32 %v610, %v610
      %v612 = vsel %vm499, %v611, 0.0
      %613 = vadd.xlane.f32.xlu0 %v612
      %v614 = vpop.xlane.xlu0 %613
      %v615 = vld [vmem:[%s385] sm:$0x1]
      %v616 = vrot.slane %v614, 4
      %v617 = vadd.f32 %v614, %v616
      %v618 = vrot.slane %v617, 2
      %v619 = vadd.f32 %v617, %v618
      %v620 = vrot.slane %v619, 1
      %v621 = vadd.f32 %v619, %v620
      %v622 = vadd.f32 %v615, %v621
      %vm623 = vcmask 0
      %624 = vst.msk [vmem:[%s385] sm:$0x1] %vm623, %v622
      %v625 = vld [vmem:[%s378] sm:$0xff]
      %v626 = vld [vmem:[%s378 + $0x8] sm:$0xff]
      %v627 = vsel %vm499, %v530, 0.0
      %628 = vadd.xlane.f32.xlu0 %v627
      %v629 = vpop.xlane.xlu0 %628
      %v630 = vsel %vm499, %v531, 0.0
      %631 = vadd.xlane.f32.xlu0 %v630
      %v632 = vpop.xlane.xlu0 %631
      %v633 = vadd.f32 %v625, %v629
      %v634 = vadd.f32 %v626, %v632
      %vm635 = vcmask 7168
      %636 = vst.msk [vmem:[%s378] sm:$0xff] %vm635, %v633
      %637 = vst.msk [vmem:[%s378 + $0x8] sm:$0xff] %vm635, %v634
      %s638 = sadd.s32 %s24, %s26
      %p639 = scmp.lt.s32.totalorder %s25, 1
      %s640 = scalar_select %p639, %s25, 1
      %p641 = scmp.lt.s32.totalorder %s638, 0
      %s642 = scalar_select %p641, %s638, 0
      %s643 = sadd.s32 %s642, %s640
      %s644 = smul.addr %s643, 8
      %s645 = scalar_lea.vmem %s4, %s644
      %s646 = sadd.s32 %s24, %s26
      %p647 = scmp.lt.s32.totalorder %s25, 1
      %s648 = scalar_select %p647, %s25, 1
      %p649 = scmp.lt.s32.totalorder %s646, 0
      %s650 = scalar_select %p649, %s646, 0
      %s651 = sadd.s32 %s650, %s648
      %s652 = scalar_lea.vmem %s5, %s651
      %p653 = scmp.lt.s32.totalorder %s24, 0
      %s654 = scalar_select %p653, %s24, 0
      %p655 = scmp.lt.s32.totalorder %s25, 1
      %s656 = scalar_select %p655, %s25, 1
      %s657 = smul.addr %s656, 2
      %s658 = smul.addr %s654, 4
      %s659 = sadd.s32 %s657, %s658
      %s660 = smul.addr %s659, 8
      %s661 = scalar_lea.vmem %s6, %s660
      %p662 = scmp.lt.s32.totalorder %s24, 0
      %s663 = scalar_select %p662, %s24, 0
      %p664 = scmp.lt.s32.totalorder %s25, 1
      %s665 = scalar_select %p664, %s25, 1
      %s666 = smul.addr %s663, 2
      %s667 = sadd.s32 %s665, %s666
      %s668 = scalar_lea.vmem %s7, %s667
      // Predicated region
      $region41: #{vector_quantizer_ema_forward.1} parent=35 // pred_check
        %p669 = pneg %p153
      $region42: #{vector_quantizer_ema_forward.1} parent=35 // pred_check_branch
        %671 = sbr.rel (%p669) target = $region44
      $region43: #{vector_quantizer_ema_forward.1} parent=35 // pred_region
        %s672 = sadd.s32 %s24, %s26
      $region44: #{vector_quantizer_ema_forward.1} parent=35 // pred_fallthru
        _
      // Predicated region
      $region45: #{vector_quantizer_ema_forward.1} parent=35 // pred_check
        %p673 = pneg %p183
      $region46: #{vector_quantizer_ema_forward.1} parent=35 // pred_check_branch
        %675 = sbr.rel (%p673) target = $region48
      $region47: #{vector_quantizer_ema_forward.1} parent=35 // pred_region
        %s676 = sadd.s32 %s24, %s26
      $region48: #{vector_quantizer_ema_forward.1} parent=35 // pred_fallthru
        _
      // Predicated region
      $region49: #{vector_quantizer_ema_forward.1} parent=35 // pred_check
        %p677 = pneg %p211
      $region50: #{vector_quantizer_ema_forward.1} parent=35 // pred_check_branch
        %679 = sbr.rel (%p677) target = $region52
      $region51: #{vector_quantizer_ema_forward.1} parent=35 // pred_region
        _
      $region52: #{vector_quantizer_ema_forward.1} parent=35 // pred_fallthru
        _
      // Predicated region
      $region53: #{vector_quantizer_ema_forward.1} parent=35 // pred_check
        %p680 = pneg %p239
      $region54: #{vector_quantizer_ema_forward.1} parent=35 // pred_check_branch
        %682 = sbr.rel (%p680) target = $region56
      $region55: #{vector_quantizer_ema_forward.1} parent=35 // pred_region
        _
      $region56: #{vector_quantizer_ema_forward.1} parent=35 // pred_fallthru
        _
    $region36: #{vector_quantizer_ema_forward.1} parent=5 // pred_fallthru
      _
    %p683 = scmp.le.s32.totalorder 2, %s14
    // Predicated region
    $region57: #{vector_quantizer_ema_forward.1} parent=5 // pred_check
      %p684 = pneg %p683
    $region58: #{vector_quantizer_ema_forward.1} parent=5 // pred_check_branch
      %686 = sbr.rel (%p684) target = $region60
    $region59: #{vector_quantizer_ema_forward.1} parent=5 // pred_region
      %s687 = ssub.s32 %s14, 2
      // Predicated region
      $region61: #{vector_quantizer_ema_forward.1} parent=59 // pred_check
        %p688 = pneg %p159
      $region62: #{vector_quantizer_ema_forward.1} parent=59 // pred_check_branch
        %690 = sbr.rel (%p688) target = $region64
      $region63: #{vector_quantizer_ema_forward.1} parent=59 // pred_region
        %s691 = sadd.s32 %s27, %s29
        %p692 = scmp.lt.s32.totalorder %s28, 1
        %s693 = scalar_select %p692, %s28, 1
        %p694 = scmp.lt.s32.totalorder %s691, 0
        %s695 = scalar_select %p694, %s691, 0
        %s696 = sadd.s32 %s695, %s693
        %s697 = smul.addr %s696, 8
        %s698 = scalar_lea.vmem %s4, %s697
      $region64: #{vector_quantizer_ema_forward.1} parent=59 // pred_fallthru
        _
      // Predicated region
      $region65: #{vector_quantizer_ema_forward.1} parent=59 // pred_check
        %p699 = pneg %p189
      $region66: #{vector_quantizer_ema_forward.1} parent=59 // pred_check_branch
        %701 = sbr.rel (%p699) target = $region68
      $region67: #{vector_quantizer_ema_forward.1} parent=59 // pred_region
        %s702 = sadd.s32 %s27, %s29
        %p703 = scmp.lt.s32.totalorder %s28, 1
        %s704 = scalar_select %p703, %s28, 1
        %p705 = scmp.lt.s32.totalorder %s702, 0
        %s706 = scalar_select %p705, %s702, 0
        %s707 = sadd.s32 %s706, %s704
        %s708 = scalar_lea.vmem %s5, %s707
      $region68: #{vector_quantizer_ema_forward.1} parent=59 // pred_fallthru
        _
      // Predicated region
      $region69: #{vector_quantizer_ema_forward.1} parent=59 // pred_check
        %p709 = pneg %p217
      $region70: #{vector_quantizer_ema_forward.1} parent=59 // pred_check_branch
        %711 = sbr.rel (%p709) target = $region72
      $region71: #{vector_quantizer_ema_forward.1} parent=59 // pred_region
        %p712 = scmp.lt.s32.totalorder %s27, 0
        %s713 = scalar_select %p712, %s27, 0
        %p714 = scmp.lt.s32.totalorder %s28, 1
        %s715 = scalar_select %p714, %s28, 1
        %s716 = smul.addr %s715, 2
        %s717 = smul.addr %s713, 4
        %s718 = sadd.s32 %s716, %s717
        %s719 = smul.addr %s718, 8
        %s720 = scalar_lea.vmem %s6, %s719
      $region72: #{vector_quantizer_ema_forward.1} parent=59 // pred_fallthru
        _
      // Predicated region
      $region73: #{vector_quantizer_ema_forward.1} parent=59 // pred_check
        %p721 = pneg %p245
      $region74: #{vector_quantizer_ema_forward.1} parent=59 // pred_check_branch
        %723 = sbr.rel (%p721) target = $region76
      $region75: #{vector_quantizer_ema_forward.1} parent=59 // pred_region
        %p724 = scmp.lt.s32.totalorder %s27, 0
        %s725 = scalar_select %p724, %s27, 0
        %p726 = scmp.lt.s32.totalorder %s28, 1
        %s727 = scalar_select %p726, %s28, 1
        %s728 = smul.addr %s725, 2
        %s729 = sadd.s32 %s727, %s728
        %s730 = scalar_lea.vmem %s7, %s729
      $region76: #{vector_quantizer_ema_forward.1} parent=59 // pred_fallthru
        _
    $region60: #{vector_quantizer_ema_forward.1} parent=5 // pred_fallthru
      _
  $region6: #{vector_quantizer_ema_forward.1} parent=0 // loop_footer
    %s18 = sadd.s32 1, %s14
  $region7: #{vector_quantizer_ema_forward.1} parent=0 // loop_footer_branch
    %13 = sbr.rel target = $region3
  $region8: #{vector_quantizer_ema_forward.1} parent=0 // loop_exit
    _

</llo_original>
